<compile_context>
chip_gen: v7x
topology: tpu7x:2x2x1
jax: 0.10.0
libtpu: 0.0.40
codegen_flags: <defaults>
</compile_context>

<pallas_src>
import jax
import jax.numpy as jnp
from jax.experimental import pallas as pl
from jax.experimental.pallas import tpu as pltpu

PACK = 8  # obs rows folded into one packed row (sublane count); 8*16 = 128 lanes

# Only split a single-tile grid in two (v7x megacore) when each half still
# moves enough bytes per step (>= 512 packed rows = 4096 batch rows ~ 0.25 MB)
# to hide the ~0.35 us per-step pipeline overhead.
_MIN_SPLIT_ROWS = 512


def _mlp_q_kernel(x_ref, w1_ref, b1_ref, w2_ref, b2_ref, w3_ref, b3_ref,
                  out_ref):
    """Fused packed 3-layer MLP (ReLU, ReLU, Identity).

    x_ref   : (tr, PACK*obs_dim)   streamed, lane-dense
    w*_ref  : kron(I_PACK, W^T)    block-diagonal weights, VMEM-resident
    b*_ref  : (1, PACK*out_f)      tiled biases, VMEM-resident
    out_ref : (tr, PACK*act_dim)   streamed
    All matmuls are plain (M,K)x(K,N): no in-kernel transposes / relayouts.
    """
    x = x_ref[...]                                            # f32 already
    h = jnp.dot(x, w1_ref[...], preferred_element_type=jnp.float32)
    h = jnp.maximum(h + b1_ref[...], 0.0)
    h = jnp.dot(h, w2_ref[...], preferred_element_type=jnp.float32)
    h = jnp.maximum(h + b2_ref[...], 0.0)
    q = jnp.dot(h, w3_ref[...], preferred_element_type=jnp.float32)
    out_ref[...] = (q + b3_ref[...]).astype(out_ref.dtype)


def _round_up(x, m):
    return (x + m - 1) // m * m


def _choose_tile_rows(n_rows, target_rows):
    """Packed-row tile: multiple of 8, never larger than the array, and >= 2
    tiles (v7x megacore) whenever there is enough work to split."""
    if n_rows <= 8:
        return n_rows                              # one block == full array
    target_rows = max(8, (target_rows // 8) * 8)
    n_tiles = pl.cdiv(n_rows, target_rows)
    if n_tiles == 1 and n_rows >= 2 * _MIN_SPLIT_ROWS:
        n_tiles = 2                                # let ("parallel",) use both TCs
    tr = _round_up(pl.cdiv(n_rows, n_tiles), 8)
    return min(tr, (n_rows // 8) * 8)              # keep the block inside the array


def pack_params(params, pack=PACK):
    """Build block-diagonal replicated weights ONCE (off the hot path).

    params: PyTorch-layout weights w{i} (out_f, in_f) and biases b{i} (out_f,).
    returns: w{i} = kron(I_pack, W_i^T)  shape (pack*in_f, pack*out_f)
             b{i} = tile(b_i, pack)[None] shape (1, pack*out_f)
    """
    packed = {"pack": pack}
    for i in (1, 2, 3):
        w = params[f"w{i}"]
        b = params[f"b{i}"]
        eye = jnp.eye(pack, dtype=w.dtype)
        packed[f"w{i}"] = jnp.kron(eye, w.T)
        packed[f"b{i}"] = jnp.tile(b, pack)[None, :]
    return packed


def discrete_mlp_q_forward(obs, packed, *, tile_batch=16384):
    """Pallas forward pass.

    obs:    (batch, obs_dim) float32
    packed: output of pack_params()
    tile_batch: batch rows per grid step (guidance: ~8192 v5e, 8192-16384 v6e,
                16384-32768 v7x; VMEM is not a constraint thanks to packing).
    returns (batch, act_dim) float32 Q-values.
    """
    batch, obs_dim = obs.shape
    pack = packed["pack"]
    din, d1 = packed["w1"].shape
    d2 = packed["w2"].shape[1]
    dout = packed["w3"].shape[1]
    act_dim = dout // pack
    assert din == pack * obs_dim, "packed params do not match obs_dim"

    # Pad batch to a multiple of `pack` only (<= pack-1 rows); the packing
    # reshape itself is contiguous and free.
    batch_p = _round_up(batch, pack)
    if batch_p != batch:
        obs = jnp.pad(obs, ((0, batch_p - batch), (0, 0)))
    n_rows = batch_p // pack
    x = obs.reshape(n_rows, din)

    tr = _choose_tile_rows(n_rows, max(1, tile_batch // pack))
    n_tiles = pl.cdiv(n_rows, tr)          # ragged last block handled by Pallas

    resident = lambda i: (0, 0)            # weights/biases: same block every step

    flops = 2 * n_rows * (din * d1 + d1 * d2 + d2 * dout)
    bytes_accessed = 4 * (n_rows * (din + dout)
                          + din * d1 + d1 + d1 * d2 + d2 + d2 * dout + dout)

    out = pl.pallas_call(
        _mlp_q_kernel,
        out_shape=jax.ShapeDtypeStruct((n_rows, dout), jnp.float32),
        grid=(n_tiles,),
        in_specs=[
            pl.BlockSpec((tr, din), lambda i: (i, 0)),   # streamed obs (lane-dense)
            pl.BlockSpec((din, d1), resident),
            pl.BlockSpec((1, d1), resident),
            pl.BlockSpec((d1, d2), resident),
            pl.BlockSpec((1, d2), resident),
            pl.BlockSpec((d2, dout), resident),
            pl.BlockSpec((1, dout), resident),
        ],
        out_specs=pl.BlockSpec((tr, dout), lambda i: (i, 0)),
        compiler_params=pltpu.CompilerParams(
            dimension_semantics=("parallel",)),
        cost_estimate=pl.CostEstimate(flops=flops, transcendentals=0,
                                      bytes_accessed=bytes_accessed),
    )(x, packed["w1"], packed["b1"], packed["w2"], packed["b2"],
      packed["w3"], packed["b3"])

    # Un-pack: contiguous reshape (free); slice only if we padded the batch.
    q = out.reshape(batch_p, act_dim)
    return q if batch_p == batch else q[:batch]


def init_params(key, obs_dim, hidden_sizes, act_dim):
    """PyTorch nn.Linear default init: U(-1/sqrt(fan_in), +1/sqrt(fan_in)).
    Weights in PyTorch (out_features, in_features) layout; biases (out_features,)."""
    sizes = [obs_dim] + list(hidden_sizes) + [act_dim]
    params = {}
    for j in range(len(sizes) - 1):
        fan_in, fan_out = sizes[j], sizes[j + 1]
        bound = 1.0 / float(fan_in) ** 0.5
        kw, kb, key = jax.random.split(key, 3)
        params[f"w{j + 1}"] = jax.random.uniform(
            kw, (fan_out, fan_in), jnp.float32, -bound, bound)
        params[f"b{j + 1}"] = jax.random.uniform(
            kb, (fan_out,), jnp.float32, -bound, bound)
    return params


def _reference(obs, params):
    """Pure-JAX reference matching the PyTorch forward pass."""
    h = jnp.maximum(obs @ params["w1"].T + params["b1"], 0.0)
    h = jnp.maximum(h @ params["w2"].T + params["b2"], 0.0)
    return h @ params["w3"].T + params["b3"]


if __name__ == "__main__":
    # Shapes consistent with DiscreteMLPQFunction(obs_dim=16, act_dim=4,
    # hidden_sizes=(32, 32), activation=nn.ReLU).
    obs_dim, act_dim = 16, 4
    hidden_sizes = (32, 32)

    key = jax.random.PRNGKey(0)
    k_obs, k_obs2, k_par = jax.random.split(key, 3)
    params = init_params(k_par, obs_dim, hidden_sizes, act_dim)
    packed = pack_params(params)          # block-diagonal weights, built once

    # Small single-tile case (batch is a multiple of PACK).
    batch = 8
    obs = jax.random.normal(k_obs, (batch, obs_dim), jnp.float32)
    q = jax.block_until_ready(discrete_mlp_q_forward(obs, packed))
    ref = _reference(obs, params)
    assert q.shape == (batch, act_dim)
    assert jnp.allclose(q, ref, atol=1e-4, rtol=1e-4)

    # Multi-tile grid + ragged last block + batch not a multiple of PACK.
    batch2 = 300
    obs2 = jax.random.normal(k_obs2, (batch2, obs_dim), jnp.float32)
    q2 = jax.block_until_ready(
        discrete_mlp_q_forward(obs2, packed, tile_batch=256))
    ref2 = _reference(obs2, params)
    assert q2.shape == (batch2, act_dim)
    assert jnp.allclose(q2, ref2, atol=1e-4, rtol=1e-4)

    print("KERNEL_OK")
</pallas_src>

<mosaic_0001>
module attributes {stable_mosaic.version = 11 : i64} {
  func.func @_mlp_q_kernel(%arg0: i32, %arg1: memref<1x128xf32, #tpu.memory_space<vmem>>, %arg2: memref<128x256xf32, #tpu.memory_space<vmem>>, %arg3: memref<1x256xf32, #tpu.memory_space<vmem>>, %arg4: memref<256x256xf32, #tpu.memory_space<vmem>>, %arg5: memref<1x256xf32, #tpu.memory_space<vmem>>, %arg6: memref<256x32xf32, #tpu.memory_space<vmem>>, %arg7: memref<1x32xf32, #tpu.memory_space<vmem>>, %arg8: memref<1x32xf32, #tpu.memory_space<vmem>>) attributes {dimension_semantics = [#tpu.dimension_semantics<parallel>], iteration_bounds = array<i64: 1>, scalar_prefetch = 0 : i64, scratch_operands = 0 : i64, tpu.core_type = #tpu.core_type<tc>, window_params = [{transform_indices = @transform_0, window_bounds = array<i64: 1, 128>}, {pipeline_mode = #tpu.pipeline_mode<synchronous>, transform_indices = @transform_1, window_bounds = array<i64: 128, 256>}, {pipeline_mode = #tpu.pipeline_mode<synchronous>, transform_indices = @transform_2, window_bounds = array<i64: 1, 256>}, {pipeline_mode = #tpu.pipeline_mode<synchronous>, transform_indices = @transform_3, window_bounds = array<i64: 256, 256>}, {pipeline_mode = #tpu.pipeline_mode<synchronous>, transform_indices = @transform_4, window_bounds = array<i64: 1, 256>}, {pipeline_mode = #tpu.pipeline_mode<synchronous>, transform_indices = @transform_5, window_bounds = array<i64: 256, 32>}, {pipeline_mode = #tpu.pipeline_mode<synchronous>, transform_indices = @transform_6, window_bounds = array<i64: 1, 32>}, {transform_indices = @transform_7, window_bounds = array<i64: 1, 32>}]} {
    %c0 = arith.constant 0 : index
    %c0_0 = arith.constant 0 : index
    %0 = vector.load %arg1[%c0, %c0_0] : memref<1x128xf32, #tpu.memory_space<vmem>>, vector<1x128xf32>
    %c0_1 = arith.constant 0 : index
    %c0_2 = arith.constant 0 : index
    %1 = vector.load %arg2[%c0_1, %c0_2] : memref<128x256xf32, #tpu.memory_space<vmem>>, vector<128x256xf32>
    %cst = arith.constant dense<0.000000e+00> : vector<1x256xf32>
    %2 = tpu.matmul %0, %1, %cst {dimension_numbers = #tpu.dot_dimension_numbers<[1], [0], [0], [1], [0, 0, 1, 1], [], []>} : vector<1x128xf32>, vector<128x256xf32>, vector<1x256xf32> -> vector<1x256xf32>
    %c0_3 = arith.constant 0 : index
    %c0_4 = arith.constant 0 : index
    %3 = vector.load %arg3[%c0_3, %c0_4] : memref<1x256xf32, #tpu.memory_space<vmem>>, vector<1x256xf32>
    %4 = arith.addf %2, %3 : vector<1x256xf32>
    %cst_5 = arith.constant 0.000000e+00 : f32
    %5 = vector.broadcast %cst_5 : f32 to vector<1x256xf32>
    %6 = arith.maximumf %4, %5 : vector<1x256xf32>
    %c0_6 = arith.constant 0 : index
    %c0_7 = arith.constant 0 : index
    %7 = vector.load %arg4[%c0_6, %c0_7] : memref<256x256xf32, #tpu.memory_space<vmem>>, vector<256x256xf32>
    %cst_8 = arith.constant dense<0.000000e+00> : vector<1x256xf32>
    %8 = tpu.matmul %6, %7, %cst_8 {dimension_numbers = #tpu.dot_dimension_numbers<[1], [0], [0], [1], [0, 0, 1, 1], [], []>} : vector<1x256xf32>, vector<256x256xf32>, vector<1x256xf32> -> vector<1x256xf32>
    %c0_9 = arith.constant 0 : index
    %c0_10 = arith.constant 0 : index
    %9 = vector.load %arg5[%c0_9, %c0_10] : memref<1x256xf32, #tpu.memory_space<vmem>>, vector<1x256xf32>
    %10 = arith.addf %8, %9 : vector<1x256xf32>
    %cst_11 = arith.constant 0.000000e+00 : f32
    %11 = vector.broadcast %cst_11 : f32 to vector<1x256xf32>
    %12 = arith.maximumf %10, %11 : vector<1x256xf32>
    %c0_12 = arith.constant 0 : index
    %c0_13 = arith.constant 0 : index
    %13 = vector.load %arg6[%c0_12, %c0_13] : memref<256x32xf32, #tpu.memory_space<vmem>>, vector<256x32xf32>
    %cst_14 = arith.constant dense<0.000000e+00> : vector<1x32xf32>
    %14 = tpu.matmul %12, %13, %cst_14 {dimension_numbers = #tpu.dot_dimension_numbers<[1], [0], [0], [1], [0, 0, 1, 1], [], []>} : vector<1x256xf32>, vector<256x32xf32>, vector<1x32xf32> -> vector<1x32xf32>
    %c0_15 = arith.constant 0 : index
    %c0_16 = arith.constant 0 : index
    %15 = vector.load %arg7[%c0_15, %c0_16] : memref<1x32xf32, #tpu.memory_space<vmem>>, vector<1x32xf32>
    %16 = arith.addf %14, %15 : vector<1x32xf32>
    %c0_17 = arith.constant 0 : index
    %c0_18 = arith.constant 0 : index
    %17 = vector.load %arg8[%c0_17, %c0_18] : memref<1x32xf32, #tpu.memory_space<vmem>>, vector<1x32xf32>
    tpu.vector_store %arg8[%c0_17, %c0_18], %16 {strides = array<i32>} : memref<1x32xf32, #tpu.memory_space<vmem>>, vector<1x32xf32>,
    return
  }
  func.func @transform_0(%arg0: i32) -> (i32, i32) {
    %c0_i32 = arith.constant 0 : i32
    %c0_i32_0 = arith.constant 0 : i32
    return %arg0, %c0_i32 : i32, i32
  }
  func.func @transform_1(%arg0: i32) -> (i32, i32) {
    %c0_i32 = arith.constant 0 : i32
    %c0_i32_0 = arith.constant 0 : i32
    %c0_i32_1 = arith.constant 0 : i32
    return %c0_i32, %c0_i32_0 : i32, i32
  }
  func.func @transform_2(%arg0: i32) -> (i32, i32) {
    %c0_i32 = arith.constant 0 : i32
    %c0_i32_0 = arith.constant 0 : i32
    %c0_i32_1 = arith.constant 0 : i32
    return %c0_i32, %c0_i32_0 : i32, i32
  }
  func.func @transform_3(%arg0: i32) -> (i32, i32) {
    %c0_i32 = arith.constant 0 : i32
    %c0_i32_0 = arith.constant 0 : i32
    %c0_i32_1 = arith.constant 0 : i32
    return %c0_i32, %c0_i32_0 : i32, i32
  }
  func.func @transform_4(%arg0: i32) -> (i32, i32) {
    %c0_i32 = arith.constant 0 : i32
    %c0_i32_0 = arith.constant 0 : i32
    %c0_i32_1 = arith.constant 0 : i32
    return %c0_i32, %c0_i32_0 : i32, i32
  }
  func.func @transform_5(%arg0: i32) -> (i32, i32) {
    %c0_i32 = arith.constant 0 : i32
    %c0_i32_0 = arith.constant 0 : i32
    %c0_i32_1 = arith.constant 0 : i32
    return %c0_i32, %c0_i32_0 : i32, i32
  }
  func.func @transform_6(%arg0: i32) -> (i32, i32) {
    %c0_i32 = arith.constant 0 : i32
    %c0_i32_0 = arith.constant 0 : i32
    %c0_i32_1 = arith.constant 0 : i32
    return %c0_i32, %c0_i32_0 : i32, i32
  }
  func.func @transform_7(%arg0: i32) -> (i32, i32) {
    %c0_i32 = arith.constant 0 : i32
    %c0_i32_0 = arith.constant 0 : i32
    return %arg0, %c0_i32 : i32, i32
  }
}

</mosaic_0001>

<llo_original>
// kernel: tpu_custom_call.1
$region0: #{tpu_custom_call.1}
  #allocation0 [shape = 'u32[]', space=smem, size = 0x4, offset = 0x4, fixed_abs, tag = 'smem constant byte address 0x4 - core index']
  #allocation1 [shape = 'u32[144,128]{1,0:T(1,128)}', space=vmem, size = 0x12000, scoped, tag = 'internal scratch']
  %s0 = inlined_call_operand.vmem [shape: f32[1,128], index: 0, kind: input, shape index: {}]
  %s1 = inlined_call_operand.vmem [shape: f32[128,256], index: 1, kind: input, shape index: {}]
  %s2 = inlined_call_operand.vmem [shape: f32[1,256], index: 2, kind: input, shape index: {}]
  %s3 = inlined_call_operand.hbm [shape: f32[256,256], index: 3, kind: input, shape index: {}]
  %s4 = inlined_call_operand.vmem [shape: f32[1,256], index: 4, kind: input, shape index: {}]
  %s5 = inlined_call_operand.vmem [shape: f32[256,32], index: 5, kind: input, shape index: {}]
  %s6 = inlined_call_operand.vmem [shape: f32[1,32], index: 6, kind: input, shape index: {}]
  %s7 = inlined_call_operand.hbm [shape: f32[1,32], index: 7, kind: output, shape index: {}]
  %s8 = sld [smem:[#allocation0]]
  $region42: #{tpu_custom_call.1} parent=0
    _
  %s10 = ssub.s32 1, %s8
  %s11 = scalar_select 0, %s10, %s8
  $region1: #{tpu_custom_call.1} parent=0
    #allocation2 [shape = 'u8[262144]{0}', space=vmem, size = 0x40000, scoped, tag = 'input window, operand 3, single buffered']
    #allocation3 [shape = 's32[1]{0}', space=sflag, size = 0x4, scoped, tag = 'scoped memory for tpu_custom_call.1']
    #allocation4 [shape = 's32[1]{0}', space=sflag, size = 0x4, scoped, tag = 'scoped memory for tpu_custom_call.1']
    #allocation5 [shape = 'u8[512]{0}', space=vmem, size = 0x400, scoped, tag = 'output window, operand 0, single buffered']
    %12 = vsyncpa [#allocation3], 0
    %13 = vsyncpa [#allocation4], 0
    // Predicated region
    $region2: #{tpu_custom_call.1} parent=1 // pred_check
      _
    $region3: #{tpu_custom_call.1} parent=1 // pred_check_branch
      %15 = sbr.rel (0) target = $region5
    $region4: #{tpu_custom_call.1} parent=1 // pred_region
      _
    $region5: #{tpu_custom_call.1} parent=1 // pred_fallthru
      _
    // Predicated region
    $region6: #{tpu_custom_call.1} parent=1 // pred_check
      _
    $region7: #{tpu_custom_call.1} parent=1 // pred_check_branch
      %17 = sbr.rel (0) target = $region9
    $region8: #{tpu_custom_call.1} parent=1 // pred_region
      _
    $region9: #{tpu_custom_call.1} parent=1 // pred_fallthru
      _
    // Predicated region
    $region10: #{tpu_custom_call.1} parent=1 // pred_check
      _
    $region11: #{tpu_custom_call.1} parent=1 // pred_check_branch
      %19 = sbr.rel (0) target = $region13
    $region12: #{tpu_custom_call.1} parent=1 // pred_region
      _
    $region13: #{tpu_custom_call.1} parent=1 // pred_fallthru
      _
    // Predicated region
    $region14: #{tpu_custom_call.1} parent=1 // pred_check
      _
    $region15: #{tpu_custom_call.1} parent=1 // pred_check_branch
      %21 = sbr.rel (0) target = $region17
    $region16: #{tpu_custom_call.1} parent=1 // pred_region
      %s23 = ssub.s32 8192, 8192
      %24 = vsyncadd [#allocation3], %s23
      %s25 = sshll.u32 [#allocation2], 4
      %s26 = int_to_ptr.vmem [resolvable:$true] %s25
      %31 = dma.hbm_to_vmem [thread:$0]  %s3, 8192, %s26, [#allocation3], 256, 256, 16
    $region17: #{tpu_custom_call.1} parent=1 // pred_fallthru
      _
    // Predicated region
    $region18: #{tpu_custom_call.1} parent=1 // pred_check
      _
    $region19: #{tpu_custom_call.1} parent=1 // pred_check_branch
      %33 = sbr.rel (0) target = $region21
    $region20: #{tpu_custom_call.1} parent=1 // pred_region
      _
    $region21: #{tpu_custom_call.1} parent=1 // pred_fallthru
      _
    // Predicated region
    $region22: #{tpu_custom_call.1} parent=1 // pred_check
      _
    $region23: #{tpu_custom_call.1} parent=1 // pred_check_branch
      %35 = sbr.rel (0) target = $region25
    $region24: #{tpu_custom_call.1} parent=1 // pred_region
      _
    $region25: #{tpu_custom_call.1} parent=1 // pred_fallthru
      _
    // Predicated region
    $region26: #{tpu_custom_call.1} parent=1 // pred_check
      _
    $region27: #{tpu_custom_call.1} parent=1 // pred_check_branch
      %37 = sbr.rel (0) target = $region29
    $region28: #{tpu_custom_call.1} parent=1 // pred_region
      _
    $region29: #{tpu_custom_call.1} parent=1 // pred_fallthru
      _
    // Predicated region
    $region30: #{tpu_custom_call.1} parent=1 // pred_check
      _
    $region31: #{tpu_custom_call.1} parent=1 // pred_check_branch
      %39 = sbr.rel (0) target = $region33
    $region32: #{tpu_custom_call.1} parent=1 // pred_region
      %40 = dma.done [#allocation3], 8192
    $region33: #{tpu_custom_call.1} parent=1 // pred_fallthru
      _
    %v41 = vld [vmem:[%s0] sm:$0x1]
    %v42 = vld [vmem:[%s1] sm:$0xff]
    %v43 = vld [vmem:[%s1 + $0x8] sm:$0xff]
    %v44 = vld [vmem:[%s1 + $0x10] sm:$0xff]
    %v45 = vld [vmem:[%s1 + $0x18] sm:$0xff]
    %v46 = vld [vmem:[%s1 + $0x20] sm:$0xff]
    %v47 = vld [vmem:[%s1 + $0x28] sm:$0xff]
    %v48 = vld [vmem:[%s1 + $0x30] sm:$0xff]
    %v49 = vld [vmem:[%s1 + $0x38] sm:$0xff]
    %v50 = vld [vmem:[%s1 + $0x40] sm:$0xff]
    %v51 = vld [vmem:[%s1 + $0x48] sm:$0xff]
    %v52 = vld [vmem:[%s1 + $0x50] sm:$0xff]
    %v53 = vld [vmem:[%s1 + $0x58] sm:$0xff]
    %v54 = vld [vmem:[%s1 + $0x60] sm:$0xff]
    %v55 = vld [vmem:[%s1 + $0x68] sm:$0xff]
    %v56 = vld [vmem:[%s1 + $0x70] sm:$0xff]
    %v57 = vld [vmem:[%s1 + $0x78] sm:$0xff]
    %v58 = vld [vmem:[%s1 + $0x80] sm:$0xff]
    %v59 = vld [vmem:[%s1 + $0x88] sm:$0xff]
    %v60 = vld [vmem:[%s1 + $0x90] sm:$0xff]
    %v61 = vld [vmem:[%s1 + $0x98] sm:$0xff]
    %v62 = vld [vmem:[%s1 + $0xa0] sm:$0xff]
    %v63 = vld [vmem:[%s1 + $0xa8] sm:$0xff]
    %v64 = vld [vmem:[%s1 + $0xb0] sm:$0xff]
    %v65 = vld [vmem:[%s1 + $0xb8] sm:$0xff]
    %v66 = vld [vmem:[%s1 + $0xc0] sm:$0xff]
    %v67 = vld [vmem:[%s1 + $0xc8] sm:$0xff]
    %v68 = vld [vmem:[%s1 + $0xd0] sm:$0xff]
    %v69 = vld [vmem:[%s1 + $0xd8] sm:$0xff]
    %v70 = vld [vmem:[%s1 + $0xe0] sm:$0xff]
    %v71 = vld [vmem:[%s1 + $0xe8] sm:$0xff]
    %v72 = vld [vmem:[%s1 + $0xf0] sm:$0xff]
    %v73 = vld [vmem:[%s1 + $0xf8] sm:$0xff]
    %v74 = vld [vmem:[%s2] sm:$0x3]
    %v76 = vlaneseq
    %v77 = vshrl.u32 %v76, 7
    %v78 = vsub.s32 0, %v77
    %v79 = vrot.slane %v74, %v78
    %v80 = vlaneseq
    %v81 = vshrl.u32 %v80, 7
    %v82 = vsub.s32 1, %v81
    %v83 = vrot.slane %v74, %v82
    %86 = vmatprep.subr.mxu0 %v43
    %87 = vmatpush1.msra.mxu0 %v42
    %88 = vmatprep.subr.mxu0 %v45
    %89 = vmatpush1.msra.mxu0 %v44
    %90 = vmatprep.subr.mxu0 %v47
    %91 = vmatpush1.msra.mxu0 %v46
    %92 = vmatprep.subr.mxu0 %v49
    %93 = vmatpush1.msra.mxu0 %v48
    %94 = vmatprep.subr.mxu0 %v51
    %95 = vmatpush1.msra.mxu0 %v50
    %96 = vmatprep.subr.mxu0 %v53
    %97 = vmatpush1.msra.mxu0 %v52
    %98 = vmatprep.subr.mxu0 %v55
    %99 = vmatpush1.msra.mxu0 %v54
    %100 = vmatprep.subr.mxu0 %v57
    %101 = vmatpush1.msra.mxu0 %v56
    %102 = vmatprep.subr.mxu0 %v59
    %103 = vmatpush1.msra.mxu0 %v58
    %104 = vmatprep.subr.mxu0 %v61
    %105 = vmatpush1.msra.mxu0 %v60
    %106 = vmatprep.subr.mxu0 %v63
    %107 = vmatpush1.msra.mxu0 %v62
    %108 = vmatprep.subr.mxu0 %v65
    %109 = vmatpush1.msra.mxu0 %v64
    %110 = vmatprep.subr.mxu0 %v67
    %111 = vmatpush1.msra.mxu0 %v66
    %112 = vmatprep.subr.mxu0 %v69
    %113 = vmatpush1.msra.mxu0 %v68
    %114 = vmatprep.subr.mxu0 %v71
    %115 = vmatpush1.msra.mxu0 %v70
    %116 = vmatprep.subr.mxu0 %v73
    %117 = vmatpush1.msra.mxu0 %v72
    %118 = vmatprep.subr.mxu0 0.0
    %119 = vmatpush1.msra.mxu0 0.0
    %120 = vmatprep.subr.mxu0 0.0
    %121 = vmatpush1.msra.mxu0 0.0
    %122 = vmatprep.subr.mxu0 0.0
    %123 = vmatpush1.msra.mxu0 0.0
    %124 = vmatprep.subr.mxu0 0.0
    %125 = vmatpush1.msra.mxu0 0.0
    %126 = vmatprep.subr.mxu0 0.0
    %127 = vmatpush1.msra.mxu0 0.0
    %128 = vmatprep.subr.mxu0 0.0
    %129 = vmatpush1.msra.mxu0 0.0
    %130 = vmatprep.subr.mxu0 0.0
    %131 = vmatpush1.msra.mxu0 0.0
    %132 = vmatprep.subr.mxu0 0.0
    %133 = vmatpush1.msra.mxu0 0.0
    %134 = vmatprep.subr.mxu0 0.0
    %135 = vmatpush1.msra.mxu0 0.0
    %136 = vmatprep.subr.mxu0 0.0
    %137 = vmatpush1.msra.mxu0 0.0
    %138 = vmatprep.subr.mxu0 0.0
    %139 = vmatpush1.msra.mxu0 0.0
    %140 = vmatprep.subr.mxu0 0.0
    %141 = vmatpush1.msra.mxu0 0.0
    %142 = vmatprep.subr.mxu0 0.0
    %143 = vmatpush1.msra.mxu0 0.0
    %144 = vmatprep.subr.mxu0 0.0
    %145 = vmatpush1.msra.mxu0 0.0
    %146 = vmatprep.subr.mxu0 0.0
    %147 = vmatpush1.msra.mxu0 0.0
    %148 = vmatprep.subr.mxu0 0.0
    %149 = vmatpush1.msra.mxu0 0.0
    %150 = vmatprep.mubr.f32.mxu0 0.0
    %151 = vmatmul.mubr.f32.gmra.mrb[0].mxu0 %v41
    %v152 = vpop.f32.mrb[0].mxu0
    %v153 = vadd.f32 %v79, %v152
    %v154 = vpop.f32.mrb[0].mxu0
    %v155 = vadd.f32 %v83, %v154
    %156 = vdwg.mxu0
    %v157 = vmax.f32 %v153, 0.0
    %v158 = vmax.f32 %v155, 0.0
    %v159 = vld [vmem:[#allocation2] sm:$0xff]
    %v160 = vld [vmem:[#allocation2 + $0x8] sm:$0xff]
    %v161 = vld [vmem:[#allocation2 + $0x10] sm:$0xff]
    %v162 = vld [vmem:[#allocation2 + $0x18] sm:$0xff]
    %v163 = vld [vmem:[#allocation2 + $0x20] sm:$0xff]
    %v164 = vld [vmem:[#allocation2 + $0x28] sm:$0xff]
    %v165 = vld [vmem:[#allocation2 + $0x30] sm:$0xff]
    %v166 = vld [vmem:[#allocation2 + $0x38] sm:$0xff]
    %v167 = vld [vmem:[#allocation2 + $0x40] sm:$0xff]
    %v168 = vld [vmem:[#allocation2 + $0x48] sm:$0xff]
    %v169 = vld [vmem:[#allocation2 + $0x50] sm:$0xff]
    %v170 = vld [vmem:[#allocation2 + $0x58] sm:$0xff]
    %v171 = vld [vmem:[#allocation2 + $0x60] sm:$0xff]
    %v172 = vld [vmem:[#allocation2 + $0x68] sm:$0xff]
    %v173 = vld [vmem:[#allocation2 + $0x70] sm:$0xff]
    %v174 = vld [vmem:[#allocation2 + $0x78] sm:$0xff]
    %v175 = vld [vmem:[#allocation2 + $0x80] sm:$0xff]
    %v176 = vld [vmem:[#allocation2 + $0x88] sm:$0xff]
    %v177 = vld [vmem:[#allocation2 + $0x90] sm:$0xff]
    %v178 = vld [vmem:[#allocation2 + $0x98] sm:$0xff]
    %v179 = vld [vmem:[#allocation2 + $0xa0] sm:$0xff]
    %v180 = vld [vmem:[#allocation2 + $0xa8] sm:$0xff]
    %v181 = vld [vmem:[#allocation2 + $0xb0] sm:$0xff]
    %v182 = vld [vmem:[#allocation2 + $0xb8] sm:$0xff]
    %v183 = vld [vmem:[#allocation2 + $0xc0] sm:$0xff]
    %v184 = vld [vmem:[#allocation2 + $0xc8] sm:$0xff]
    %v185 = vld [vmem:[#allocation2 + $0xd0] sm:$0xff]
    %v186 = vld [vmem:[#allocation2 + $0xd8] sm:$0xff]
    %v187 = vld [vmem:[#allocation2 + $0xe0] sm:$0xff]
    %v188 = vld [vmem:[#allocation2 + $0xe8] sm:$0xff]
    %v189 = vld [vmem:[#allocation2 + $0xf0] sm:$0xff]
    %v190 = vld [vmem:[#allocation2 + $0xf8] sm:$0xff]
    %v191 = vld [vmem:[#allocation2 + $0x100] sm:$0xff]
    %v192 = vld [vmem:[#allocation2 + $0x108] sm:$0xff]
    %v193 = vld [vmem:[#allocation2 + $0x110] sm:$0xff]
    %v194 = vld [vmem:[#allocation2 + $0x118] sm:$0xff]
    %v195 = vld [vmem:[#allocation2 + $0x120] sm:$0xff]
    %v196 = vld [vmem:[#allocation2 + $0x128] sm:$0xff]
    %v197 = vld [vmem:[#allocation2 + $0x130] sm:$0xff]
    %v198 = vld [vmem:[#allocation2 + $0x138] sm:$0xff]
    %v199 = vld [vmem:[#allocation2 + $0x140] sm:$0xff]
    %v200 = vld [vmem:[#allocation2 + $0x148] sm:$0xff]
    %v201 = vld [vmem:[#allocation2 + $0x150] sm:$0xff]
    %v202 = vld [vmem:[#allocation2 + $0x158] sm:$0xff]
    %v203 = vld [vmem:[#allocation2 + $0x160] sm:$0xff]
    %v204 = vld [vmem:[#allocation2 + $0x168] sm:$0xff]
    %v205 = vld [vmem:[#allocation2 + $0x170] sm:$0xff]
    %v206 = vld [vmem:[#allocation2 + $0x178] sm:$0xff]
    %v207 = vld [vmem:[#allocation2 + $0x180] sm:$0xff]
    %v208 = vld [vmem:[#allocation2 + $0x188] sm:$0xff]
    %v209 = vld [vmem:[#allocation2 + $0x190] sm:$0xff]
    %v210 = vld [vmem:[#allocation2 + $0x198] sm:$0xff]
    %v211 = vld [vmem:[#allocation2 + $0x1a0] sm:$0xff]
    %v212 = vld [vmem:[#allocation2 + $0x1a8] sm:$0xff]
    %v213 = vld [vmem:[#allocation2 + $0x1b0] sm:$0xff]
    %v214 = vld [vmem:[#allocation2 + $0x1b8] sm:$0xff]
    %v215 = vld [vmem:[#allocation2 + $0x1c0] sm:$0xff]
    %v216 = vld [vmem:[#allocation2 + $0x1c8] sm:$0xff]
    %v217 = vld [vmem:[#allocation2 + $0x1d0] sm:$0xff]
    %v218 = vld [vmem:[#allocation2 + $0x1d8] sm:$0xff]
    %v219 = vld [vmem:[#allocation2 + $0x1e0] sm:$0xff]
    %v220 = vld [vmem:[#allocation2 + $0x1e8] sm:$0xff]
    %v221 = vld [vmem:[#allocation2 + $0x1f0] sm:$0xff]
    %v222 = vld [vmem:[#allocation2 + $0x1f8] sm:$0xff]
    %v223 = vld [vmem:[%s4] sm:$0x3]
    %v225 = vlaneseq
    %v226 = vshrl.u32 %v225, 7
    %v227 = vsub.s32 0, %v226
    %v228 = vrot.slane %v223, %v227
    %v229 = vlaneseq
    %v230 = vshrl.u32 %v229, 7
    %v231 = vsub.s32 1, %v230
    %v232 = vrot.slane %v223, %v231
    %235 = vmatprep.subr.mxu0 %v160
    %236 = vmatpush1.msra.mxu0 %v159
    %237 = vmatprep.subr.mxu0 %v162
    %238 = vmatpush1.msra.mxu0 %v161
    %239 = vmatprep.subr.mxu0 %v164
    %240 = vmatpush1.msra.mxu0 %v163
    %241 = vmatprep.subr.mxu0 %v166
    %242 = vmatpush1.msra.mxu0 %v165
    %243 = vmatprep.subr.mxu0 %v168
    %244 = vmatpush1.msra.mxu0 %v167
    %245 = vmatprep.subr.mxu0 %v170
    %246 = vmatpush1.msra.mxu0 %v169
    %247 = vmatprep.subr.mxu0 %v172
    %248 = vmatpush1.msra.mxu0 %v171
    %249 = vmatprep.subr.mxu0 %v174
    %250 = vmatpush1.msra.mxu0 %v173
    %251 = vmatprep.subr.mxu0 %v176
    %252 = vmatpush1.msra.mxu0 %v175
    %253 = vmatprep.subr.mxu0 %v178
    %254 = vmatpush1.msra.mxu0 %v177
    %255 = vmatprep.subr.mxu0 %v180
    %256 = vmatpush1.msra.mxu0 %v179
    %257 = vmatprep.subr.mxu0 %v182
    %258 = vmatpush1.msra.mxu0 %v181
    %259 = vmatprep.subr.mxu0 %v184
    %260 = vmatpush1.msra.mxu0 %v183
    %261 = vmatprep.subr.mxu0 %v186
    %262 = vmatpush1.msra.mxu0 %v185
    %263 = vmatprep.subr.mxu0 %v188
    %264 = vmatpush1.msra.mxu0 %v187
    %265 = vmatprep.subr.mxu0 %v190
    %266 = vmatpush1.msra.mxu0 %v189
    %267 = vmatprep.subr.mxu0 %v192
    %268 = vmatpush1.msra.mxu0 %v191
    %269 = vmatprep.subr.mxu0 %v194
    %270 = vmatpush1.msra.mxu0 %v193
    %271 = vmatprep.subr.mxu0 %v196
    %272 = vmatpush1.msra.mxu0 %v195
    %273 = vmatprep.subr.mxu0 %v198
    %274 = vmatpush1.msra.mxu0 %v197
    %275 = vmatprep.subr.mxu0 %v200
    %276 = vmatpush1.msra.mxu0 %v199
    %277 = vmatprep.subr.mxu0 %v202
    %278 = vmatpush1.msra.mxu0 %v201
    %279 = vmatprep.subr.mxu0 %v204
    %280 = vmatpush1.msra.mxu0 %v203
    %281 = vmatprep.subr.mxu0 %v206
    %282 = vmatpush1.msra.mxu0 %v205
    %283 = vmatprep.subr.mxu0 %v208
    %284 = vmatpush1.msra.mxu0 %v207
    %285 = vmatprep.subr.mxu0 %v210
    %286 = vmatpush1.msra.mxu0 %v209
    %287 = vmatprep.subr.mxu0 %v212
    %288 = vmatpush1.msra.mxu0 %v211
    %289 = vmatprep.subr.mxu0 %v214
    %290 = vmatpush1.msra.mxu0 %v213
    %291 = vmatprep.subr.mxu0 %v216
    %292 = vmatpush1.msra.mxu0 %v215
    %293 = vmatprep.subr.mxu0 %v218
    %294 = vmatpush1.msra.mxu0 %v217
    %295 = vmatprep.subr.mxu0 %v220
    %296 = vmatpush1.msra.mxu0 %v219
    %297 = vmatprep.subr.mxu0 %v222
    %298 = vmatpush1.msra.mxu0 %v221
    %299 = vmatprep.mubr.f32.mxu0 %v158
    %300 = vmatmul.mubr.f32.gmra.mrb[0].mxu0 %v157
    %v301 = vpop.f32.mrb[0].mxu0
    %v302 = vadd.f32 %v228, %v301
    %v303 = vpop.f32.mrb[0].mxu0
    %v304 = vadd.f32 %v232, %v303
    %305 = vdwg.mxu0
    %v306 = vmax.f32 %v302, 0.0
    %v307 = vmax.f32 %v304, 0.0
    %v308 = vld [vmem:[%s5] sm:$0xff]
    %v309 = vld [vmem:[%s5 + $0x8] sm:$0xff]
    %v310 = vld [vmem:[%s5 + $0x10] sm:$0xff]
    %v311 = vld [vmem:[%s5 + $0x18] sm:$0xff]
    %v312 = vld [vmem:[%s5 + $0x20] sm:$0xff]
    %v313 = vld [vmem:[%s5 + $0x28] sm:$0xff]
    %v314 = vld [vmem:[%s5 + $0x30] sm:$0xff]
    %v315 = vld [vmem:[%s5 + $0x38] sm:$0xff]
    %v316 = vld [vmem:[%s5 + $0x40] sm:$0xff]
    %v317 = vld [vmem:[%s5 + $0x48] sm:$0xff]
    %v318 = vld [vmem:[%s5 + $0x50] sm:$0xff]
    %v319 = vld [vmem:[%s5 + $0x58] sm:$0xff]
    %v320 = vld [vmem:[%s5 + $0x60] sm:$0xff]
    %v321 = vld [vmem:[%s5 + $0x68] sm:$0xff]
    %v322 = vld [vmem:[%s5 + $0x70] sm:$0xff]
    %v323 = vld [vmem:[%s5 + $0x78] sm:$0xff]
    %v324 = vld [vmem:[%s5 + $0x80] sm:$0xff]
    %v325 = vld [vmem:[%s5 + $0x88] sm:$0xff]
    %v326 = vld [vmem:[%s5 + $0x90] sm:$0xff]
    %v327 = vld [vmem:[%s5 + $0x98] sm:$0xff]
    %v328 = vld [vmem:[%s5 + $0xa0] sm:$0xff]
    %v329 = vld [vmem:[%s5 + $0xa8] sm:$0xff]
    %v330 = vld [vmem:[%s5 + $0xb0] sm:$0xff]
    %v331 = vld [vmem:[%s5 + $0xb8] sm:$0xff]
    %v332 = vld [vmem:[%s5 + $0xc0] sm:$0xff]
    %v333 = vld [vmem:[%s5 + $0xc8] sm:$0xff]
    %v334 = vld [vmem:[%s5 + $0xd0] sm:$0xff]
    %v335 = vld [vmem:[%s5 + $0xd8] sm:$0xff]
    %v336 = vld [vmem:[%s5 + $0xe0] sm:$0xff]
    %v337 = vld [vmem:[%s5 + $0xe8] sm:$0xff]
    %v338 = vld [vmem:[%s5 + $0xf0] sm:$0xff]
    %v339 = vld [vmem:[%s5 + $0xf8] sm:$0xff]
    %v340 = vld [vmem:[%s6] sm:$0x1]
    %341 = vmatprep.subr.mxu0 0.0
    %342 = vmatpush1.msra.mxu0 %v308
    %343 = vmatprep.subr.mxu0 0.0
    %344 = vmatpush1.msra.mxu0 %v309
    %345 = vmatprep.subr.mxu0 0.0
    %346 = vmatpush1.msra.mxu0 %v310
    %347 = vmatprep.subr.mxu0 0.0
    %348 = vmatpush1.msra.mxu0 %v311
    %349 = vmatprep.subr.mxu0 0.0
    %350 = vmatpush1.msra.mxu0 %v312
    %351 = vmatprep.subr.mxu0 0.0
    %352 = vmatpush1.msra.mxu0 %v313
    %353 = vmatprep.subr.mxu0 0.0
    %354 = vmatpush1.msra.mxu0 %v314
    %355 = vmatprep.subr.mxu0 0.0
    %356 = vmatpush1.msra.mxu0 %v315
    %357 = vmatprep.subr.mxu0 0.0
    %358 = vmatpush1.msra.mxu0 %v316
    %359 = vmatprep.subr.mxu0 0.0
    %360 = vmatpush1.msra.mxu0 %v317
    %361 = vmatprep.subr.mxu0 0.0
    %362 = vmatpush1.msra.mxu0 %v318
    %363 = vmatprep.subr.mxu0 0.0
    %364 = vmatpush1.msra.mxu0 %v319
    %365 = vmatprep.subr.mxu0 0.0
    %366 = vmatpush1.msra.mxu0 %v320
    %367 = vmatprep.subr.mxu0 0.0
    %368 = vmatpush1.msra.mxu0 %v321
    %369 = vmatprep.subr.mxu0 0.0
    %370 = vmatpush1.msra.mxu0 %v322
    %371 = vmatprep.subr.mxu0 0.0
    %372 = vmatpush1.msra.mxu0 %v323
    %373 = vmatprep.subr.mxu0 0.0
    %374 = vmatpush1.msra.mxu0 %v324
    %375 = vmatprep.subr.mxu0 0.0
    %376 = vmatpush1.msra.mxu0 %v325
    %377 = vmatprep.subr.mxu0 0.0
    %378 = vmatpush1.msra.mxu0 %v326
    %379 = vmatprep.subr.mxu0 0.0
    %380 = vmatpush1.msra.mxu0 %v327
    %381 = vmatprep.subr.mxu0 0.0
    %382 = vmatpush1.msra.mxu0 %v328
    %383 = vmatprep.subr.mxu0 0.0
    %384 = vmatpush1.msra.mxu0 %v329
    %385 = vmatprep.subr.mxu0 0.0
    %386 = vmatpush1.msra.mxu0 %v330
    %387 = vmatprep.subr.mxu0 0.0
    %388 = vmatpush1.msra.mxu0 %v331
    %389 = vmatprep.subr.mxu0 0.0
    %390 = vmatpush1.msra.mxu0 %v332
    %391 = vmatprep.subr.mxu0 0.0
    %392 = vmatpush1.msra.mxu0 %v333
    %393 = vmatprep.subr.mxu0 0.0
    %394 = vmatpush1.msra.mxu0 %v334
    %395 = vmatprep.subr.mxu0 0.0
    %396 = vmatpush1.msra.mxu0 %v335
    %397 = vmatprep.subr.mxu0 0.0
    %398 = vmatpush1.msra.mxu0 %v336
    %399 = vmatprep.subr.mxu0 0.0
    %400 = vmatpush1.msra.mxu0 %v337
    %401 = vmatprep.subr.mxu0 0.0
    %402 = vmatpush1.msra.mxu0 %v338
    %403 = vmatprep.subr.mxu0 0.0
    %404 = vmatpush1.msra.mxu0 %v339
    %405 = vmatprep.mubr.f32.mxu0 %v307
    %406 = vmatmul.mubr.f32.gmra.mrb[0].mxu0 %v306
    %v407 = vpop.f32.mrb[0].mxu0
    %v408 = vadd.f32 %v340, %v407
    %v409 = vpop.f32.mrb[0].mxu0
    %410 = vdwg.mxu0
    %vm411 = vcmask 253952
    %412 = vst.msk [vmem:[#allocation5] sm:$0x1] %vm411, %v408
    // Predicated region
    $region34: #{tpu_custom_call.1} parent=1 // pred_check
      _
    $region35: #{tpu_custom_call.1} parent=1 // pred_check_branch
      %414 = sbr.rel (0) target = $region37
    $region36: #{tpu_custom_call.1} parent=1 // pred_region
      %s416 = ssub.s32 16, 16
      %417 = vsyncadd [#allocation4], %s416
      %s419 = sshll.u32 [#allocation5], 4
      %s420 = int_to_ptr.vmem [resolvable:$true] %s419
      %422 = dma.vmem_to_hbm [thread:$0]  %s420, 16, %s7, [#allocation4]
    $region37: #{tpu_custom_call.1} parent=1 // pred_fallthru
      _
    // Predicated region
    $region38: #{tpu_custom_call.1} parent=1 // pred_check
      _
    $region39: #{tpu_custom_call.1} parent=1 // pred_check_branch
      %424 = sbr.rel (0) target = $region41
    $region40: #{tpu_custom_call.1} parent=1 // pred_region
      %425 = dma.done [#allocation4], 16
    $region41: #{tpu_custom_call.1} parent=1 // pred_fallthru
      _
    %426 = vsyncpa [#allocation3], 1
    %427 = vsyncpa [#allocation4], 1

</llo_original>
